<compile_context>
chip_gen: v7x
topology: tpu7x:2x2x1
jax: 0.10.0
libtpu: 0.0.40
codegen_flags: <defaults>
</compile_context>

<pallas_src>
import jax
import jax.numpy as jnp
from jax.experimental import pallas as pl
from jax.experimental.pallas import tpu as pltpu


_LANE = 128


def _noise_injection_kernel(w_ref, img_ref, noise_ref, o_ref):
    # w_ref     : (1,) f32 in SMEM                  (learned scalar)
    # img_ref   : (bb, C, hw_t) block of the image
    # noise_ref : (bb, 1, hw_t) block of the noise  (sublane-broadcast over C)
    # o_ref     : (bb, C, hw_t) block of the output
    w = w_ref[0]
    o_ref[...] = (img_ref[...] + w * noise_ref[...]).astype(o_ref.dtype)


def _vmem_capacity_bytes():
    try:
        return int(pltpu.get_tpu_info().vmem_capacity_bytes)
    except Exception:
        # Conservative fallback: v7x per-TensorCore VMEM (smallest generation).
        return 64 * 1024 * 1024


def _plan_tiles(b, c, hw, itemsize):
    """Pick (bb, hw_t, vmem_limit_bytes) for the (B, C, HW) layout.

    The budget counts the full double-buffered per-step footprint:
      2 x [ image-in tile + output tile (C padded to the sublane multiple)
            + noise tile (single channel row padded to a full sublane group) ].
    """
    vmem_cap = _vmem_capacity_bytes()

    # Sublane packing: 8 rows of 32-bit words; sub-32-bit dtypes pack along
    # sublanes (bf16 -> 16-row minor tiles, int8/fp8 -> 32).
    sub_mult = 8 * max(1, 4 // itemsize)
    c_pad = -(-c // sub_mult) * sub_mult

    # Total double-buffered footprint budget (<= ~48 MiB and <= 60% of VMEM,
    # so v7x's 64 MiB/TC keeps headroom while v5e/v6e get ~8 MiB image tiles).
    budget_total = min(48 * 1024 * 1024, int(vmem_cap * 0.6))
    bytes_per_unit = 2 * (2 * c_pad + sub_mult) * itemsize  # per (row x lane)
    elems_budget = max(1, budget_total // bytes_per_unit)   # max bb * hw_t

    if hw <= elems_budget:
        # Whole HW fits: pack several batch rows per step.
        hw_t = hw
        bb = max(1, min(b, elems_budget // hw))
        if b >= 2:
            # Keep >=2 grid steps so both v7x TensorCores get work.
            bb = min(bb, -(-b // 2))
    else:
        # A single batch row is bigger than the budget: tile HW in 128-lane
        # multiples so large feature maps never blow VMEM.
        bb = 1
        hw_t = max(_LANE, (elems_budget // _LANE) * _LANE)
        hw_t = min(hw_t, hw)

    # If batch alone cannot provide a second grid step, split HW (lane tiles
    # stay multiples of 128) so the second TensorCore is not idle.
    if (bb >= b and hw_t == hw and hw >= 2 * _LANE
            and c_pad * hw * itemsize > (1 << 20)):
        half = -(-hw // 2)
        hw_t = -(-half // _LANE) * _LANE

    hw_t_pad = -(-hw_t // _LANE) * _LANE
    footprint = 2 * bb * (2 * c_pad + sub_mult) * hw_t_pad * itemsize
    vmem_limit = min(int(vmem_cap * 0.85),
                     max(32 * 1024 * 1024, 2 * footprint))
    return bb, hw_t, vmem_limit


def noise_injection_forward(weight, image, noise=None, *, key=None):
    """Replicates NoiseInjection.forward.

    weight: scalar (or shape-(1,)) learned parameter.
    image : (B, C, H, W)
    noise : (B, 1, H, W) or None. If None, standard-normal noise is drawn
            using `key`.
    """
    b, c, h, w = image.shape
    if noise is None:
        if key is None:
            raise ValueError("need a PRNG key when noise is None")
        # TODO(synk): for small C this could be generated in-kernel with
        # pltpu.prng_seed / pltpu.prng_random_bits to save one HBM round trip,
        # at the cost of not being bit-identical to jax.random.normal.
        noise = jax.random.normal(key, (b, 1, h, w), dtype=image.dtype)

    hw = h * w
    img2 = image.reshape(b, c, hw)
    noise2 = noise.reshape(b, 1, hw)
    w_param = jnp.asarray(weight, dtype=jnp.float32).reshape(1)

    itemsize = image.dtype.itemsize
    bb, hw_t, vmem_limit = _plan_tiles(b, c, hw, itemsize)
    grid = (pl.cdiv(b, bb), pl.cdiv(hw, hw_t))

    out = pl.pallas_call(
        _noise_injection_kernel,
        out_shape=jax.ShapeDtypeStruct((b, c, hw), image.dtype),
        grid_spec=pltpu.PrefetchScalarGridSpec(
            num_scalar_prefetch=0,
            grid=grid,
            in_specs=[
                # Scalar weight: lives in SMEM, not pipelined through VMEM.
                pl.BlockSpec(memory_space=pltpu.MemorySpace.SMEM),
                pl.BlockSpec((bb, c, hw_t), lambda i, j: (i, 0, j)),
                pl.BlockSpec((bb, 1, hw_t), lambda i, j: (i, 0, j)),
            ],
            out_specs=pl.BlockSpec((bb, c, hw_t), lambda i, j: (i, 0, j)),
        ),
        compiler_params=pltpu.CompilerParams(
            dimension_semantics=("parallel", "parallel"),
            vmem_limit_bytes=vmem_limit,
        ),
    )(w_param, img2, noise2)

    return out.reshape(b, c, h, w)


def _reference(weight, image, noise):
    return image + jnp.asarray(weight, jnp.float32).reshape(1, 1, 1, 1) * noise


if __name__ == "__main__":
    key = jax.random.PRNGKey(0)
    k_img, k_noise, k_w, k_img2, k_noise2 = jax.random.split(key, 5)

    # Main check: shapes implied by the module (small).
    batch, channels, height, width = 2, 4, 16, 16
    image = jax.random.normal(
        k_img, (batch, channels, height, width), dtype=jnp.float32)
    noise = jax.random.normal(
        k_noise, (batch, 1, height, width), dtype=jnp.float32)
    # PyTorch initializes weight to 0; use a nonzero value so the FMA path
    # is actually exercised by the check.
    weight = jax.random.normal(k_w, (1,), dtype=jnp.float32)

    out = jax.block_until_ready(noise_injection_forward(weight, image, noise))
    ref = _reference(weight, image, noise)
    assert out.shape == image.shape and out.dtype == image.dtype
    assert jnp.allclose(out, ref, rtol=1e-6, atol=1e-6), "mismatch vs reference"

    # Ragged-grid check: odd batch, HW not a multiple of 128 (cdiv path).
    b2, c2, h2, w2 = 3, 4, 12, 12
    image2 = jax.random.normal(k_img2, (b2, c2, h2, w2), dtype=jnp.float32)
    noise2 = jax.random.normal(k_noise2, (b2, 1, h2, w2), dtype=jnp.float32)
    out2 = jax.block_until_ready(
        noise_injection_forward(weight, image2, noise2))
    ref2 = _reference(weight, image2, noise2)
    assert jnp.allclose(out2, ref2, rtol=1e-6, atol=1e-6), "ragged mismatch"

    print("KERNEL_OK")
</pallas_src>

<mosaic_0001>
module attributes {stable_mosaic.version = 11 : i64} {
  func.func @_noise_injection_kernel(%arg0: i32, %arg1: i32, %arg2: memref<1xf32, #tpu.memory_space<smem>>, %arg3: memref<1x4x256xf32, #tpu.memory_space<vmem>>, %arg4: memref<1x1x256xf32, #tpu.memory_space<vmem>>, %arg5: memref<1x4x256xf32, #tpu.memory_space<vmem>>) attributes {dimension_semantics = [#tpu.dimension_semantics<parallel>, #tpu.dimension_semantics<parallel>], iteration_bounds = array<i64: 2, 1>, scalar_prefetch = 0 : i64, scratch_operands = 0 : i64, tpu.core_type = #tpu.core_type<tc>, window_params = [{transform_indices = @transform_0, window_bounds = array<i64: 1>}, {transform_indices = @transform_1, window_bounds = array<i64: 1, 4, 256>}, {transform_indices = @transform_2, window_bounds = array<i64: 1, 1, 256>}, {transform_indices = @transform_3, window_bounds = array<i64: 1, 4, 256>}]} {
    %c0 = arith.constant 0 : index
    %0 = memref.load %arg2[%c0] : memref<1xf32, #tpu.memory_space<smem>>
    %c0_0 = arith.constant 0 : index
    %c0_1 = arith.constant 0 : index
    %c0_2 = arith.constant 0 : index
    %1 = vector.load %arg3[%c0_0, %c0_1, %c0_2] : memref<1x4x256xf32, #tpu.memory_space<vmem>>, vector<1x4x256xf32>
    %c0_3 = arith.constant 0 : index
    %c0_4 = arith.constant 0 : index
    %c0_5 = arith.constant 0 : index
    %2 = vector.load %arg4[%c0_3, %c0_4, %c0_5] : memref<1x1x256xf32, #tpu.memory_space<vmem>>, vector<1x1x256xf32>
    %3 = vector.broadcast %0 : f32 to vector<1x1x256xf32>
    %4 = arith.mulf %3, %2 : vector<1x1x256xf32>
    %5 = vector.broadcast %4 : vector<1x1x256xf32> to vector<1x4x256xf32>
    %6 = arith.addf %1, %5 : vector<1x4x256xf32>
    %c0_6 = arith.constant 0 : index
    %c0_7 = arith.constant 0 : index
    %c0_8 = arith.constant 0 : index
    %7 = vector.load %arg5[%c0_6, %c0_7, %c0_8] : memref<1x4x256xf32, #tpu.memory_space<vmem>>, vector<1x4x256xf32>
    tpu.vector_store %arg5[%c0_6, %c0_7, %c0_8], %6 {strides = array<i32>} : memref<1x4x256xf32, #tpu.memory_space<vmem>>, vector<1x4x256xf32>,
    return
  }
  func.func @transform_0(%arg0: i32, %arg1: i32) -> i32 {
    %c0_i32 = arith.constant 0 : i32
    %c0_i32_0 = arith.constant 0 : i32
    return %c0_i32 : i32
  }
  func.func @transform_1(%arg0: i32, %arg1: i32) -> (i32, i32, i32) {
    %c0_i32 = arith.constant 0 : i32
    %c0_i32_0 = arith.constant 0 : i32
    return %arg0, %c0_i32, %arg1 : i32, i32, i32
  }
  func.func @transform_2(%arg0: i32, %arg1: i32) -> (i32, i32, i32) {
    %c0_i32 = arith.constant 0 : i32
    %c0_i32_0 = arith.constant 0 : i32
    return %arg0, %c0_i32, %arg1 : i32, i32, i32
  }
  func.func @transform_3(%arg0: i32, %arg1: i32) -> (i32, i32, i32) {
    %c0_i32 = arith.constant 0 : i32
    %c0_i32_0 = arith.constant 0 : i32
    return %arg0, %c0_i32, %arg1 : i32, i32, i32
  }
}

</mosaic_0001>

<llo_original>
// kernel: tpu_custom_call.1
$region0: #{tpu_custom_call.1}
  #allocation0 [shape = 'u32[]', space=smem, size = 0x4, offset = 0x4, fixed_abs, tag = 'smem constant byte address 0x4 - core index']
  #allocation1 [shape = 'u32[144,128]{1,0:T(1,128)}', space=vmem, size = 0x12000, scoped, tag = 'internal scratch']
  #allocation2 [shape = 'f32[1]{0:T(128)S(6)}', space=smem, size = 0x200, scoped, tag = 'scoped memory for tpu_custom_call.1']
  %s0 = inlined_call_operand.<no memory space> [shape: f32[1], index: 0, kind: input, shape index: {}]
  %s1 = inlined_call_operand.hbm [shape: f32[2,4,256], index: 1, kind: input, shape index: {}]
  %s2 = inlined_call_operand.vmem [shape: f32[2,1,256], index: 2, kind: input, shape index: {}]
  %s3 = inlined_call_operand.hbm [shape: f32[2,4,256], index: 3, kind: output, shape index: {}]
  %s4 = sld [smem:[#allocation0]]
  $region49: #{tpu_custom_call.1} parent=0
    _
  %s6 = ssub.s32 1, %s4
  %s7 = scalar_select 0, %s6, %s4
  %8 = sst [smem:[#allocation2]] %s0
  $region1: #{tpu_custom_call.1} parent=0
    #allocation3 [shape = 'u8[8192]{0}', space=vmem, size = 0x2000, scoped, tag = 'input window, operand 1']
    #allocation4 [shape = 's32[2]{0}', space=sflag, size = 0x8, scoped, tag = 'scoped memory for tpu_custom_call.1']
    #allocation5 [shape = 's32[2]{0}', space=sflag, size = 0x8, scoped, tag = 'scoped memory for tpu_custom_call.1']
    #allocation6 [shape = 'u8[8192]{0}', space=vmem, size = 0x2000, scoped, tag = 'output window, operand 0']
    %9 = vsyncpa [#allocation4], 0
    %s10 = scalar_lea.sflag [#allocation4], 1
    %11 = vsyncpa %s10, 0
    %12 = vsyncpa [#allocation5], 0
    %s13 = scalar_lea.sflag [#allocation5], 1
    %14 = vsyncpa %s13, 0
    loop: start=0, step=1, limit=4
    $region2: #{tpu_custom_call.1} parent=1 // loop_pre_header
      _
    $region3: #{tpu_custom_call.1} parent=1 // loop_header
      %s16 = sphi 0, %s20
      %p17 = scmp.ge.s32.totalorder %s16, 4
      %s23 = sphi 0, %s35
      %s24 = sphi 0, %s31
      %s25 = sphi 0, %s23
      %s26 = sphi 0, %s24
      %s27 = sphi 0, %s25
      %s28 = sphi 0, %s26
      %s36 = sphi 0, %s36
      %s38 = sphi 0, %s36
      %s39 = sphi 0, %s38
      %s53 = sphi 0, %s39
      %s61 = sphi 0, %s63
      %s64 = sphi 0, %s61
      %s65 = sphi 0, %s64
      %s81 = sphi 0, %s65
      %s89 = sphi 0, %s91
      %s92 = sphi 0, %s89
      %s93 = sphi 0, %s92
      %s109 = sphi 0, %s93
      %s117 = sphi 0, %s119
      %s120 = sphi 0, %s117
      %s121 = sphi 0, %s120
      %s137 = sphi 0, %s121
    $region4: #{tpu_custom_call.1} parent=1 // loop_header_branch
      %19 = sbr.rel (%p17) target = $region8
    $region5: #{tpu_custom_call.1} parent=1 // loop_body
      %s21 = ssub.s32 %s16, 1
      %s22 = ssub.s32 %s16, 2
      %s29 = sadd.s32 1, %s24
      %p30 = scmp.ge.s32.totalorder %s29, 1
      %s31 = scalar_select %p30, 0, %s29
      %s32 = sadd.s32 1, %s23
      %s33 = scalar_select %p30, %s32, %s23
      %p34 = scmp.ge.s32.totalorder %s33, 2
      %s35 = scalar_select %p34, 0, %s33
      %s37 = sadd.s32 %s36, 1
      %p40 = scmp.eq.s32.totalorder %s16, 1
      %p41 = scmp.ne.s32.totalorder %s36, %s38
      %p42 = scmp.eq.s32.totalorder %s16, 0
      %p43 = por %p41, %p42
      %p44 = scmp.ne.s32.totalorder %s36, %s38
      %p45 = scmp.eq.s32.totalorder %s21, 1
      %p46 = por %p44, %p45
      %p47 = scmp.ne.s32.totalorder %s38, %s39
      %p48 = scmp.eq.s32.totalorder %s21, 0
      %p49 = por %p47, %p48
      %p50 = scmp.ne.s32.totalorder %s38, %s39
      %p51 = scmp.eq.s32.totalorder %s22, 1
      %p52 = por %p50, %p51
      %p54 = scmp.ne.s32.totalorder %s39, %s53
      %p55 = scmp.eq.s32.totalorder %s22, 0
      %p56 = por %p54, %p55
      %s57 = ssub.s32 %s23, %s35
      %s58 = ssub.s32 %s24, %s31
      %s59 = sor.u32 %s57, %s58
      %p60 = scmp.eq.s32.totalorder %s59, 0
      %s62 = sadd.s32 %s61, 1
      %s63 = scalar_select %p60, %s61, %s62
      %p66 = pneg %p60
      %p67 = scmp.eq.s32.totalorder %s16, 1
      %p68 = por %p66, %p67
      %p69 = scmp.ne.s32.totalorder %s61, %s64
      %p70 = scmp.eq.s32.totalorder %s16, 0
      %p71 = por %p69, %p70
      %p72 = scmp.ne.s32.totalorder %s61, %s64
      %p73 = scmp.eq.s32.totalorder %s21, 1
      %p74 = por %p72, %p73
      %p75 = scmp.ne.s32.totalorder %s64, %s65
      %p76 = scmp.eq.s32.totalorder %s21, 0
      %p77 = por %p75, %p76
      %p78 = scmp.ne.s32.totalorder %s64, %s65
      %p79 = scmp.eq.s32.totalorder %s22, 1
      %p80 = por %p78, %p79
      %p82 = scmp.ne.s32.totalorder %s65, %s81
      %p83 = scmp.eq.s32.totalorder %s22, 0
      %p84 = por %p82, %p83
      %s85 = ssub.s32 %s23, %s35
      %s86 = ssub.s32 %s24, %s31
      %s87 = sor.u32 %s85, %s86
      %p88 = scmp.eq.s32.totalorder %s87, 0
      %s90 = sadd.s32 %s89, 1
      %s91 = scalar_select %p88, %s89, %s90
      %p94 = pneg %p88
      %p95 = scmp.eq.s32.totalorder %s16, 1
      %p96 = por %p94, %p95
      %p97 = scmp.ne.s32.totalorder %s89, %s92
      %p98 = scmp.eq.s32.totalorder %s16, 0
      %p99 = por %p97, %p98
      %p100 = scmp.ne.s32.totalorder %s89, %s92
      %p101 = scmp.eq.s32.totalorder %s21, 1
      %p102 = por %p100, %p101
      %p103 = scmp.ne.s32.totalorder %s92, %s93
      %p104 = scmp.eq.s32.totalorder %s21, 0
      %p105 = por %p103, %p104
      %p106 = scmp.ne.s32.totalorder %s92, %s93
      %p107 = scmp.eq.s32.totalorder %s22, 1
      %p108 = por %p106, %p107
      %p110 = scmp.ne.s32.totalorder %s93, %s109
      %p111 = scmp.eq.s32.totalorder %s22, 0
      %p112 = por %p110, %p111
      %s113 = ssub.s32 %s23, %s35
      %s114 = ssub.s32 %s24, %s31
      %s115 = sor.u32 %s113, %s114
      %p116 = scmp.eq.s32.totalorder %s115, 0
      %s118 = sadd.s32 %s117, 1
      %s119 = scalar_select %p116, %s117, %s118
      %p122 = pneg %p116
      %p123 = scmp.eq.s32.totalorder %s16, 1
      %p124 = por %p122, %p123
      %p125 = scmp.ne.s32.totalorder %s117, %s120
      %p126 = scmp.eq.s32.totalorder %s16, 0
      %p127 = por %p125, %p126
      %p128 = scmp.ne.s32.totalorder %s117, %s120
      %p129 = scmp.eq.s32.totalorder %s21, 1
      %p130 = por %p128, %p129
      %p131 = scmp.ne.s32.totalorder %s120, %s121
      %p132 = scmp.eq.s32.totalorder %s21, 0
      %p133 = por %p131, %p132
      %p134 = scmp.ne.s32.totalorder %s120, %s121
      %p135 = scmp.eq.s32.totalorder %s22, 1
      %p136 = por %p134, %p135
      %p138 = scmp.ne.s32.totalorder %s121, %s137
      %p139 = scmp.eq.s32.totalorder %s22, 0
      %p140 = por %p138, %p139
      %p141 = scmp.le.s32.totalorder 1, %s16
      %p142 = scmp.lt.s32.totalorder %s16, 3
      %p143 = pnand %p141, %p142
      %p144 = pneg %p143
      // Predicated region
      $region9: #{tpu_custom_call.1} parent=5 // pred_check
        _
      $region10: #{tpu_custom_call.1} parent=5 // pred_check_branch
        %146 = sbr.rel (%p143) target = $region12
      $region11: #{tpu_custom_call.1} parent=5 // pred_region
        %s147 = ssub.s32 %s16, 1
        // Predicated region
        $region13: #{tpu_custom_call.1} parent=11 // pred_check
          %p148 = pneg %p49
        $region14: #{tpu_custom_call.1} parent=11 // pred_check_branch
          %150 = sbr.rel (%p148) target = $region16
        $region15: #{tpu_custom_call.1} parent=11 // pred_region
          _
        $region16: #{tpu_custom_call.1} parent=11 // pred_fallthru
          _
      $region12: #{tpu_custom_call.1} parent=5 // pred_fallthru
        _
      %p151 = scmp.lt.s32.totalorder %s16, 2
      // Predicated region
      $region17: #{tpu_custom_call.1} parent=5 // pred_check
        %p152 = pneg %p151
      $region18: #{tpu_custom_call.1} parent=5 // pred_check_branch
        %154 = sbr.rel (%p152) target = $region20
      $region19: #{tpu_custom_call.1} parent=5 // pred_region
        // Predicated region
        $region21: #{tpu_custom_call.1} parent=19 // pred_check
          %p155 = pneg %p71
        $region22: #{tpu_custom_call.1} parent=19 // pred_check_branch
          %157 = sbr.rel (%p155) target = $region24
        $region23: #{tpu_custom_call.1} parent=19 // pred_region
          %s158 = sand.u32 %s61, 1
          %s159 = scalar_lea.sflag [#allocation4], %s158
          %s160 = sand.u32 %s61, 1
          %s161 = smul.addr %s160, 8
          %s162 = scalar_lea.vmem [#allocation3], %s161
          %s163 = smul.u32 2, %s24
          %s165 = ssub.s32 128, 128
          %166 = vsyncadd %s159, %s165
          %s167 = smul.addr %s23, 2
          %s168 = sadd.s32 %s163, %s167
          %s169 = smul.addr %s168, 64
          %s170 = scalar_lea.hbm %s1, %s169
          %s172 = sshll.u32 %s162, 4
          %s173 = int_to_ptr.vmem [resolvable:$true] %s172
          %175 = dma.hbm_to_vmem [thread:$0]  %s170, 128, %s173, %s159
        $region24: #{tpu_custom_call.1} parent=19 // pred_fallthru
          _
        // Predicated region
        $region25: #{tpu_custom_call.1} parent=19 // pred_check
          %p176 = pneg %p99
        $region26: #{tpu_custom_call.1} parent=19 // pred_check_branch
          %178 = sbr.rel (%p176) target = $region28
        $region27: #{tpu_custom_call.1} parent=19 // pred_region
          %s179 = smul.u32 2, %s24
          %p180 = scmp.lt.s32.totalorder %s23, 1
          %s181 = scalar_select %p180, %s23, 1
          %p182 = scmp.lt.s32.totalorder %s179, 1
          %s183 = scalar_select %p182, %s179, 1
          %s184 = smul.addr %s181, 2
          %s185 = sadd.s32 %s183, %s184
          %s186 = scalar_lea.vmem %s2, %s185
          %s187 = smul.u32 2, %s24
        $region28: #{tpu_custom_call.1} parent=19 // pred_fallthru
          _
      $region20: #{tpu_custom_call.1} parent=5 // pred_fallthru
        _
      %p188 = scmp.le.s32.totalorder 1, %s16
      %p189 = scmp.lt.s32.totalorder %s16, 3
      %p190 = pnand %p188, %p189
      %p191 = pneg %p190
      // Predicated region
      $region29: #{tpu_custom_call.1} parent=5 // pred_check
        _
      $region30: #{tpu_custom_call.1} parent=5 // pred_check_branch
        %193 = sbr.rel (%p190) target = $region32
      $region31: #{tpu_custom_call.1} parent=5 // pred_region
        %s194 = ssub.s32 %s16, 1
        %s195 = sand.u32 %s64, 1
        %s196 = scalar_lea.sflag [#allocation4], %s195
        %s197 = sand.u32 %s64, 1
        %s198 = smul.addr %s197, 8
        %s199 = scalar_lea.vmem [#allocation3], %s198
        // Predicated region
        $region33: #{tpu_custom_call.1} parent=31 // pred_check
          %p200 = pneg %p77
        $region34: #{tpu_custom_call.1} parent=31 // pred_check_branch
          %202 = sbr.rel (%p200) target = $region36
        $region35: #{tpu_custom_call.1} parent=31 // pred_region
          %203 = dma.done %s196, 128
        $region36: #{tpu_custom_call.1} parent=31 // pred_fallthru
          _
        %p204 = pneg %p49
        %p205 = pneg %p46
        %s206 = sand.u32 %s64, 1
        %s207 = scalar_lea.sflag [#allocation4], %s206
        %s208 = sand.u32 %s64, 1
        %s209 = smul.addr %s208, 8
        %s210 = scalar_lea.vmem [#allocation3], %s209
        %p211 = pneg %p77
        %p212 = pneg %p74
        %s213 = smul.u32 2, %s26
        %p214 = scmp.lt.s32.totalorder %s25, 1
        %s215 = scalar_select %p214, %s25, 1
        %p216 = scmp.lt.s32.totalorder %s213, 1
        %s217 = scalar_select %p216, %s213, 1
        %s218 = smul.addr %s215, 2
        %s219 = sadd.s32 %s217, %s218
        %s220 = scalar_lea.vmem %s2, %s219
        %p221 = pneg %p105
        %p222 = pneg %p102
        %p223 = pneg %p133
        %p224 = pneg %p130
        %s225 = sand.u32 %s120, 1
        %s226 = scalar_lea.sflag [#allocation5], %s225
        %s227 = sand.u32 %s120, 1
        %s228 = smul.addr %s227, 8
        %s229 = scalar_lea.vmem [#allocation6], %s228
        %s230 = smul.u32 2, %s26
        %s231 = smul.u32 2, %s26
        %p232 = scmp.lt.s32.totalorder %s25, 1
        %s233 = scalar_select %p232, %s25, 1
        %p234 = scmp.lt.s32.totalorder %s231, 1
        %s235 = scalar_select %p234, %s231, 1
        %s236 = smul.addr %s233, 2
        %s237 = sadd.s32 %s235, %s236
        %s238 = scalar_lea.vmem %s2, %s237
        %s239 = smul.u32 2, %s26
        %s240 = smul.u32 2, %s26
        %s241 = sld [smem:[#allocation2]]
        %v242 = vld [vmem:[%s199] sm:$0xff]
        %v243 = vld [vmem:[%s238] sm:$0x3]
        %v244 = vstv %s241
        %v245 = vmul.f32 %v244, %v243
        %v247 = vlaneseq
        %v248 = vshrl.u32 %v247, 7
        %v249 = vsub.s32 0, %v248
        %v250 = vrot.slane %v245, %v249
        %v251 = vlaneseq
        %v252 = vshrl.u32 %v251, 7
        %v253 = vsub.s32 1, %v252
        %v254 = vrot.slane %v245, %v253
        %v255 = vcombine.low %v250, %v254
        %v257 = vadd.f32 %v242, %v255
        %258 = vst [vmem:[%s229] sm:$0xff] %v257
        %s259 = sand.u32 %s120, 1
        %s260 = scalar_lea.sflag [#allocation5], %s259
        %s261 = sand.u32 %s120, 1
        %s262 = smul.addr %s261, 8
        %s263 = scalar_lea.vmem [#allocation6], %s262
        // Predicated region
        $region37: #{tpu_custom_call.1} parent=31 // pred_check
          %p264 = pneg %p130
        $region38: #{tpu_custom_call.1} parent=31 // pred_check_branch
          %266 = sbr.rel (%p264) target = $region40
        $region39: #{tpu_custom_call.1} parent=31 // pred_region
          %s267 = smul.u32 2, %s26
          %s269 = ssub.s32 128, 128
          %270 = vsyncadd %s260, %s269
          %s271 = smul.addr %s25, 2
          %s272 = sadd.s32 %s267, %s271
          %s273 = smul.addr %s272, 64
          %s274 = scalar_lea.hbm %s3, %s273
          %s276 = sshll.u32 %s263, 4
          %s277 = int_to_ptr.vmem [resolvable:$true] %s276
          %279 = dma.vmem_to_hbm [thread:$0]  %s277, 128, %s274, %s260
        $region40: #{tpu_custom_call.1} parent=31 // pred_fallthru
          _
      $region32: #{tpu_custom_call.1} parent=5 // pred_fallthru
        _
      %p280 = scmp.le.s32.totalorder 2, %s16
      // Predicated region
      $region41: #{tpu_custom_call.1} parent=5 // pred_check
        %p281 = pneg %p280
      $region42: #{tpu_custom_call.1} parent=5 // pred_check_branch
        %283 = sbr.rel (%p281) target = $region44
      $region43: #{tpu_custom_call.1} parent=5 // pred_region
        %s284 = ssub.s32 %s16, 2
        // Predicated region
        $region45: #{tpu_custom_call.1} parent=43 // pred_check
          %p285 = pneg %p136
        $region46: #{tpu_custom_call.1} parent=43 // pred_check_branch
          %287 = sbr.rel (%p285) target = $region48
        $region47: #{tpu_custom_call.1} parent=43 // pred_region
          %s288 = sand.u32 %s121, 1
          %s289 = scalar_lea.sflag [#allocation5], %s288
          %s290 = sand.u32 %s121, 1
          %s291 = smul.addr %s290, 8
          %s292 = scalar_lea.vmem [#allocation6], %s291
          %293 = dma.done %s289, 128
        $region48: #{tpu_custom_call.1} parent=43 // pred_fallthru
          _
      $region44: #{tpu_custom_call.1} parent=5 // pred_fallthru
        _
    $region6: #{tpu_custom_call.1} parent=1 // loop_footer
      %s20 = sadd.s32 1, %s16
    $region7: #{tpu_custom_call.1} parent=1 // loop_footer_branch
      %15 = sbr.rel target = $region3
    $region8: #{tpu_custom_call.1} parent=1 // loop_exit
      _
    %294 = vsyncpa [#allocation4], 1
    %s295 = scalar_lea.sflag [#allocation4], 1
    %296 = vsyncpa %s295, 1
    %297 = vsyncpa [#allocation5], 1
    %s298 = scalar_lea.sflag [#allocation5], 1
    %299 = vsyncpa %s298, 1

</llo_original>
